<compile_context>
chip_gen: v5e
topology: v5e:2x2
jax: 0.10.0
libtpu: 0.0.40
codegen_flags: <defaults>
</compile_context>

<pallas_src>
import functools

import numpy as np
import jax
import jax.numpy as jnp
from jax.experimental import pallas as pl
from jax.experimental.pallas import tpu as pltpu

LANE = 128
SUBLANE = 8
DEFAULT_BLOCK_M = 512  # rows per grid step (512x128 f32 = 256 KiB per input)


def _wing_loss_block(pred, targ, *, width, inv_curvature, C):
    """Elementwise wing loss on f32 blocks (constants are Python floats)."""
    diff = jnp.abs(targ - pred)
    return jnp.where(diff < width,
                     width * jnp.log1p(diff * inv_curvature),
                     diff - C)


def _wing_sum_kernel(pred_ref, targ_ref, out_ref, *, width, inv_curvature, C):
    """Per-block partial sum (no weight). out_ref block: (1, 8, 128)."""
    p = pred_ref[...].astype(jnp.float32)
    t = targ_ref[...].astype(jnp.float32)
    loss = _wing_loss_block(p, t, width=width, inv_curvature=inv_curvature, C=C)
    bm = loss.shape[0]
    # (bm,128) -> (bm//8, 8, 128); sum over axis 0 is pure vreg-wise VPU adds.
    out_ref[0] = loss.reshape(bm // SUBLANE, SUBLANE, LANE).sum(axis=0)


def _wing_sum_w_kernel(pred_ref, targ_ref, w_ref, out_ref, *,
                       width, inv_curvature, C):
    """Per-block partial sum with elementwise weight."""
    p = pred_ref[...].astype(jnp.float32)
    t = targ_ref[...].astype(jnp.float32)
    loss = _wing_loss_block(p, t, width=width, inv_curvature=inv_curvature, C=C)
    loss = loss * w_ref[...].astype(jnp.float32)
    bm = loss.shape[0]
    out_ref[0] = loss.reshape(bm // SUBLANE, SUBLANE, LANE).sum(axis=0)


def _wing_elem_kernel(pred_ref, targ_ref, out_ref, *, width, inv_curvature, C):
    """Elementwise (reduction='none') wing loss, no weight."""
    p = pred_ref[...].astype(jnp.float32)
    t = targ_ref[...].astype(jnp.float32)
    out_ref[...] = _wing_loss_block(p, t, width=width,
                                    inv_curvature=inv_curvature, C=C)


def _wing_elem_w_kernel(pred_ref, targ_ref, w_ref, out_ref, *,
                        width, inv_curvature, C):
    """Elementwise (reduction='none') wing loss with weight."""
    p = pred_ref[...].astype(jnp.float32)
    t = targ_ref[...].astype(jnp.float32)
    loss = _wing_loss_block(p, t, width=width, inv_curvature=inv_curvature, C=C)
    out_ref[...] = loss * w_ref[...].astype(jnp.float32)


def wing_loss(prediction, target, weight=None, reduction="mean",
              width=10.0, curvature=2.0):
    """JAX/Pallas equivalent of WingLoss.forward.

    TODO(synk): add_weights_and_normalize source is not provided; implemented
    the standard semantics: multiply by `weight` if given, then mean/sum/none
    over all elements.
    """
    width = float(width)
    curvature = float(curvature)
    inv_curvature = 1.0 / curvature
    C = width - width * float(np.log(1.0 + width / curvature))

    orig_shape = prediction.shape
    n = int(np.prod(orig_shape)) if orig_shape else 1

    pred = prediction.reshape(-1)
    targ = target.reshape(-1)
    has_w = weight is not None
    w = weight.reshape(-1) if has_w else None

    # Choose a block size: as large as possible up to DEFAULT_BLOCK_M rows.
    rows_needed = -(-n // LANE)                                  # ceil(n/128)
    block_m = min(DEFAULT_BLOCK_M, ((rows_needed + SUBLANE - 1)
                                    // SUBLANE) * SUBLANE)
    block_m = max(block_m, SUBLANE)

    # Pad to a multiple of one (block_m, 128) block; padding contributes 0 loss
    # (pred = targ = 0 -> diff = 0 -> log1p(0) = 0; padded weight is 0 too).
    pad = (-n) % (block_m * LANE)
    if pad:
        pred = jnp.pad(pred, (0, pad))
        targ = jnp.pad(targ, (0, pad))
        if has_w:
            w = jnp.pad(w, (0, pad))
    rows = (n + pad) // LANE
    grid_n = rows // block_m

    pred2 = pred.reshape(rows, LANE)
    targ2 = targ.reshape(rows, LANE)
    w2 = w.reshape(rows, LANE) if has_w else None

    consts = dict(width=width, inv_curvature=inv_curvature, C=C)
    in_spec = pl.BlockSpec((block_m, LANE), lambda i: (i, 0))
    cparams = pltpu.CompilerParams(dimension_semantics=("parallel",))

    if reduction == "none":
        kernel = functools.partial(
            _wing_elem_w_kernel if has_w else _wing_elem_kernel, **consts)
        operands = (pred2, targ2, w2) if has_w else (pred2, targ2)
        out = pl.pallas_call(
            kernel,
            out_shape=jax.ShapeDtypeStruct((rows, LANE), jnp.float32),
            grid=(grid_n,),
            in_specs=[in_spec] * len(operands),
            out_specs=pl.BlockSpec((block_m, LANE), lambda i: (i, 0)),
            compiler_params=cparams,
        )(*operands)
        return out.reshape(-1)[:n].reshape(orig_shape)

    if reduction not in ("mean", "sum"):
        raise ValueError(f"unsupported reduction: {reduction}")

    kernel = functools.partial(
        _wing_sum_w_kernel if has_w else _wing_sum_kernel, **consts)
    operands = (pred2, targ2, w2) if has_w else (pred2, targ2)
    partials = pl.pallas_call(
        kernel,
        out_shape=jax.ShapeDtypeStruct((grid_n, SUBLANE, LANE), jnp.float32),
        grid=(grid_n,),
        in_specs=[in_spec] * len(operands),
        out_specs=pl.BlockSpec((1, SUBLANE, LANE), lambda i: (i, 0, 0)),
        compiler_params=cparams,
    )(*operands)

    total = jnp.sum(partials)
    if reduction == "sum":
        return total
    return total / jnp.float32(n)


def _wing_loss_ref(prediction, target, weight=None, reduction="mean",
                   width=10.0, curvature=2.0):
    """Pure-JAX reference for correctness checking."""
    C = width - width * np.log(1.0 + width / curvature)
    diff = jnp.abs(target.astype(jnp.float32) - prediction.astype(jnp.float32))
    loss = jnp.where(diff < width, width * jnp.log1p(diff / curvature), diff - C)
    if weight is not None:
        loss = loss * weight.astype(jnp.float32)
    if reduction == "mean":
        return loss.mean()
    if reduction == "sum":
        return loss.sum()
    return loss


if __name__ == "__main__":
    key = jax.random.PRNGKey(0)
    k1, k2, k3, k4, k5 = jax.random.split(key, 5)

    # Landmark-regression-style inputs (WingLoss has no learned parameters).
    prediction = 8.0 * jax.random.normal(k1, (2, 4, 16, 16), dtype=jnp.float32)
    target = 8.0 * jax.random.normal(k2, (2, 4, 16, 16), dtype=jnp.float32)
    weight = jax.random.uniform(k3, (2, 4, 16, 16), dtype=jnp.float32)

    out_mean = jax.block_until_ready(wing_loss(prediction, target, reduction="mean"))
    out_sum = jax.block_until_ready(wing_loss(prediction, target, reduction="sum"))
    out_none = jax.block_until_ready(wing_loss(prediction, target, reduction="none"))
    out_wmean = jax.block_until_ready(
        wing_loss(prediction, target, weight=weight, reduction="mean"))

    assert np.allclose(np.asarray(out_mean),
                       np.asarray(_wing_loss_ref(prediction, target, reduction="mean")),
                       rtol=1e-5, atol=1e-5)
    assert np.allclose(np.asarray(out_sum),
                       np.asarray(_wing_loss_ref(prediction, target, reduction="sum")),
                       rtol=1e-5, atol=1e-4)
    assert np.allclose(np.asarray(out_none),
                       np.asarray(_wing_loss_ref(prediction, target, reduction="none")),
                       rtol=1e-5, atol=1e-5)
    assert np.allclose(np.asarray(out_wmean),
                       np.asarray(_wing_loss_ref(prediction, target, weight=weight,
                                                 reduction="mean")),
                       rtol=1e-5, atol=1e-5)

    # Larger case that exercises multiple grid steps / partial-sum path.
    p_big = 8.0 * jax.random.normal(k4, (2, 4, 128, 128), dtype=jnp.float32)
    t_big = 8.0 * jax.random.normal(k5, (2, 4, 128, 128), dtype=jnp.float32)
    out_big = jax.block_until_ready(wing_loss(p_big, t_big, reduction="mean"))
    assert np.allclose(np.asarray(out_big),
                       np.asarray(_wing_loss_ref(p_big, t_big, reduction="mean")),
                       rtol=1e-5, atol=1e-5)

    print("KERNEL_OK")
</pallas_src>

<mosaic_0001>
module attributes {stable_mosaic.version = 11 : i64} {
  func.func @_wing_sum_kernel(%arg0: i32, %arg1: memref<16x128xf32, #tpu.memory_space<vmem>>, %arg2: memref<16x128xf32, #tpu.memory_space<vmem>>, %arg3: memref<1x8x128xf32, #tpu.memory_space<vmem>>) attributes {dimension_semantics = [#tpu.dimension_semantics<parallel>], iteration_bounds = array<i64: 1>, scalar_prefetch = 0 : i64, scratch_operands = 0 : i64, tpu.core_type = #tpu.core_type<tc>, window_params = [{transform_indices = @transform_0, window_bounds = array<i64: 16, 128>}, {transform_indices = @transform_1, window_bounds = array<i64: 16, 128>}, {transform_indices = @transform_2, window_bounds = array<i64: 1, 8, 128>}]} {
    %c0 = arith.constant 0 : index
    %c0_0 = arith.constant 0 : index
    %0 = vector.load %arg1[%c0, %c0_0] : memref<16x128xf32, #tpu.memory_space<vmem>>, vector<16x128xf32>
    %c0_1 = arith.constant 0 : index
    %c0_2 = arith.constant 0 : index
    %1 = vector.load %arg2[%c0_1, %c0_2] : memref<16x128xf32, #tpu.memory_space<vmem>>, vector<16x128xf32>
    %2 = arith.subf %1, %0 : vector<16x128xf32>
    %3 = math.absf %2 : vector<16x128xf32>
    %cst = arith.constant 1.000000e+01 : f32
    %4 = vector.broadcast %cst : f32 to vector<16x128xf32>
    %5 = arith.cmpf olt, %3, %4 : vector<16x128xf32>
    %cst_3 = arith.constant 5.000000e-01 : f32
    %6 = vector.broadcast %cst_3 : f32 to vector<16x128xf32>
    %7 = arith.mulf %3, %6 : vector<16x128xf32>
    %8 = math.log1p %7 : vector<16x128xf32>
    %cst_4 = arith.constant 1.000000e+01 : f32
    %9 = vector.broadcast %cst_4 : f32 to vector<16x128xf32>
    %10 = arith.mulf %9, %8 : vector<16x128xf32>
    %cst_5 = arith.constant -7.9175949 : f32
    %11 = vector.broadcast %cst_5 : f32 to vector<16x128xf32>
    %12 = arith.subf %3, %11 : vector<16x128xf32>
    %13 = arith.select %5, %10, %12 : vector<16x128xi1>, vector<16x128xf32>
    %14 = vector.shape_cast %13 : vector<16x128xf32> to vector<2x8x128xf32>
    %cst_6 = arith.constant dense<0.000000e+00> : vector<8x128xf32>
    %15 = vector.multi_reduction <add>, %14, %cst_6 [0] : vector<2x8x128xf32> to vector<8x128xf32>
    %c0_7 = arith.constant 0 : index
    %c0_8 = arith.constant 0 : index
    %c0_9 = arith.constant 0 : index
    %16 = vector.load %arg3[%c0_7, %c0_8, %c0_9] : memref<1x8x128xf32, #tpu.memory_space<vmem>>, vector<1x8x128xf32>
    %17 = vector.shape_cast %16 : vector<1x8x128xf32> to vector<8x128xf32>
    %18 = vector.shape_cast %15 : vector<8x128xf32> to vector<1x8x128xf32>
    tpu.vector_store %arg3[%c0_7, %c0_8, %c0_9], %18 {strides = array<i32>} : memref<1x8x128xf32, #tpu.memory_space<vmem>>, vector<1x8x128xf32>,
    return
  }
  func.func @transform_0(%arg0: i32) -> (i32, i32) {
    %c0_i32 = arith.constant 0 : i32
    %c0_i32_0 = arith.constant 0 : i32
    return %arg0, %c0_i32 : i32, i32
  }
  func.func @transform_1(%arg0: i32) -> (i32, i32) {
    %c0_i32 = arith.constant 0 : i32
    %c0_i32_0 = arith.constant 0 : i32
    return %arg0, %c0_i32 : i32, i32
  }
  func.func @transform_2(%arg0: i32) -> (i32, i32, i32) {
    %c0_i32 = arith.constant 0 : i32
    %c0_i32_0 = arith.constant 0 : i32
    %c0_i32_1 = arith.constant 0 : i32
    return %arg0, %c0_i32, %c0_i32_0 : i32, i32, i32
  }
}

</mosaic_0001>

<llo_original>
// kernel: tpu_custom_call.1
$region0: #{tpu_custom_call.1}
  #allocation0 [shape = 'u32[]', space=smem, size = 0x4, offset = 0x4, fixed_abs, tag = 'smem constant byte address 0x4 - core index']
  #allocation1 [shape = 'u32[72,128]{1,0:T(1,128)}', space=vmem, size = 0x9000, scoped, tag = 'internal scratch']
  %s0 = inlined_call_operand.hbm [shape: f32[16,128], index: 0, kind: input, shape index: {}]
  %s1 = inlined_call_operand.hbm [shape: f32[16,128], index: 1, kind: input, shape index: {}]
  %s2 = inlined_call_operand.hbm [shape: f32[1,8,128], index: 2, kind: output, shape index: {}]
  %s3 = sld [smem:[#allocation0]]
  $region26: #{tpu_custom_call.1} parent=0
    _
  %s5 = ssub.s32 1, %s3
  %s6 = scalar_select 0, %s5, %s3
  $region1: #{tpu_custom_call.1} parent=0
    #allocation2 [shape = 'u8[8192]{0}', space=vmem, size = 0x2000, scoped, tag = 'input window, operand 0, single buffered']
    #allocation3 [shape = 's32[1]{0}', space=sflag, size = 0x4, scoped, tag = 'scoped memory for tpu_custom_call.1']
    #allocation4 [shape = 's32[1]{0}', space=sflag, size = 0x4, scoped, tag = 'scoped memory for tpu_custom_call.1']
    #allocation5 [shape = 'u8[8192]{0}', space=vmem, size = 0x2000, scoped, tag = 'input window, operand 1, single buffered']
    #allocation6 [shape = 's32[1]{0}', space=sflag, size = 0x4, scoped, tag = 'scoped memory for tpu_custom_call.1']
    #allocation7 [shape = 'u8[4096]{0}', space=vmem, size = 0x1000, scoped, tag = 'output window, operand 0, single buffered']
    %7 = vsyncpa [#allocation3], 0
    %8 = vsyncpa [#allocation6], 0
    %9 = vsyncpa [#allocation4], 0
    // Predicated region
    $region2: #{tpu_custom_call.1} parent=1 // pred_check
      _
    $region3: #{tpu_custom_call.1} parent=1 // pred_check_branch
      %11 = sbr.rel (0) target = $region5
    $region4: #{tpu_custom_call.1} parent=1 // pred_region
      %13 = vsyncadd [#allocation3], 0
      %s14 = sshll.u32 %s0, 4
      %s15 = int_to_ptr.hbm [resolvable:$true] %s14
      %s16 = sshll.u32 [#allocation2], 4
      %s17 = int_to_ptr.vmem [resolvable:$true] %s16
      %22 = dma.hbm_to_vmem [thread:$0]  %s15, 256, %s17, [#allocation3], 128, 128, 8
    $region5: #{tpu_custom_call.1} parent=1 // pred_fallthru
      _
    // Predicated region
    $region6: #{tpu_custom_call.1} parent=1 // pred_check
      _
    $region7: #{tpu_custom_call.1} parent=1 // pred_check_branch
      %24 = sbr.rel (0) target = $region9
    $region8: #{tpu_custom_call.1} parent=1 // pred_region
      %26 = vsyncadd [#allocation6], 0
      %s27 = sshll.u32 %s1, 4
      %s28 = int_to_ptr.hbm [resolvable:$true] %s27
      %s29 = sshll.u32 [#allocation5], 4
      %s30 = int_to_ptr.vmem [resolvable:$true] %s29
      %35 = dma.hbm_to_vmem [thread:$0]  %s28, 256, %s30, [#allocation6], 128, 128, 8
    $region9: #{tpu_custom_call.1} parent=1 // pred_fallthru
      _
    // Predicated region
    $region10: #{tpu_custom_call.1} parent=1 // pred_check
      _
    $region11: #{tpu_custom_call.1} parent=1 // pred_check_branch
      %37 = sbr.rel (0) target = $region13
    $region12: #{tpu_custom_call.1} parent=1 // pred_region
      %39 = dma.done [#allocation3], 256
    $region13: #{tpu_custom_call.1} parent=1 // pred_fallthru
      _
    // Predicated region
    $region14: #{tpu_custom_call.1} parent=1 // pred_check
      _
    $region15: #{tpu_custom_call.1} parent=1 // pred_check_branch
      %41 = sbr.rel (0) target = $region17
    $region16: #{tpu_custom_call.1} parent=1 // pred_region
      %43 = dma.done [#allocation6], 256
    $region17: #{tpu_custom_call.1} parent=1 // pred_fallthru
      _
    %v44 = vld [vmem:[#allocation2] sm:$0xff]
    %v45 = vld [vmem:[#allocation2 + $0x8] sm:$0xff]
    %v46 = vld [vmem:[#allocation5] sm:$0xff]
    %v47 = vld [vmem:[#allocation5 + $0x8] sm:$0xff]
    %v48 = vsub.f32 %v46, %v44
    %v49 = vsub.f32 %v47, %v45
    %v50 = vand.u32 2147483647, %v48
    %v51 = vand.u32 2147483647, %v49
    %vm52 = vcmp.lt.f32.partialorder %v50, 10.0
    %vm53 = vcmp.lt.f32.partialorder %v51, 10.0
    %v54 = vmul.f32 %v50, 0.5
    %v55 = vmul.f32 %v51, 0.5
    %v56 = vadd.f32 %v54, 1.0
    %v57 = vlog2.pop %v56
    %v58 = vmul.f32 %v57, 0.6931472
    %v59 = vmul.f32 -0.5, %v54
    %v60 = vadd.f32 %v59, 1.0
    %v61 = vmul.f32 %v60, %v54
    %v62 = vand.u32 2147483647, %v54
    %vm63 = vcmp.lt.f32.partialorder %v62, 0.0004427343
    %v64 = vsel %vm63, %v61, %v58
    %v65 = vadd.f32 %v55, 1.0
    %v66 = vlog2.pop %v65
    %v67 = vmul.f32 %v66, 0.6931472
    %v68 = vmul.f32 -0.5, %v55
    %v69 = vadd.f32 %v68, 1.0
    %v70 = vmul.f32 %v69, %v55
    %v71 = vand.u32 2147483647, %v55
    %vm72 = vcmp.lt.f32.partialorder %v71, 0.0004427343
    %v73 = vsel %vm72, %v70, %v67
    %v74 = vmul.f32 %v64, 10.0
    %v75 = vmul.f32 %v73, 10.0
    %v76 = vsub.f32 %v50, -7.917595
    %v77 = vsub.f32 %v51, -7.917595
    %v78 = vsel %vm52, %v74, %v76
    %v79 = vsel %vm53, %v75, %v77
    %v80 = vadd.f32 %v78, %v79
    %81 = vst [vmem:[#allocation7] sm:$0xff] %v80
    // Predicated region
    $region18: #{tpu_custom_call.1} parent=1 // pred_check
      _
    $region19: #{tpu_custom_call.1} parent=1 // pred_check_branch
      %83 = sbr.rel (0) target = $region21
    $region20: #{tpu_custom_call.1} parent=1 // pred_region
      %85 = vsyncadd [#allocation4], 0
      %s87 = sshll.u32 [#allocation7], 4
      %s88 = int_to_ptr.vmem [resolvable:$true] %s87
      %s89 = sshll.u32 %s2, 4
      %s90 = int_to_ptr.hbm [resolvable:$true] %s89
      %92 = dma.vmem_to_hbm [thread:$0]  %s88, 128, %s90, [#allocation4]
    $region21: #{tpu_custom_call.1} parent=1 // pred_fallthru
      _
    // Predicated region
    $region22: #{tpu_custom_call.1} parent=1 // pred_check
      _
    $region23: #{tpu_custom_call.1} parent=1 // pred_check_branch
      %94 = sbr.rel (0) target = $region25
    $region24: #{tpu_custom_call.1} parent=1 // pred_region
      %96 = dma.done [#allocation4], 128
    $region25: #{tpu_custom_call.1} parent=1 // pred_fallthru
      _
    %97 = vsyncpa [#allocation3], 1
    %98 = vsyncpa [#allocation6], 1
    %99 = vsyncpa [#allocation4], 1

</llo_original>
